<compile_context>
chip_gen: v7x
topology: tpu7x:2x2x1
jax: 0.10.0
libtpu: 0.0.40
codegen_flags: <defaults>
</compile_context>

<pallas_src>
import jax
import jax.numpy as jnp
from jax.experimental import pallas as pl
from jax.experimental.pallas import tpu as pltpu


def _round_up(n, m):
    return ((n + m - 1) // m) * m


def _mlp_kernel(x_ref, w1_ref, b1_ref, w2_ref, b2_ref, o_ref):
    """One batch tile, batch dense on sublane x lane.

      x_ref : [F, TR, LC]  VMEM  feature-major activations
      w1_ref: [H, F]       SMEM  (PyTorch nn.Linear weight layout)
      b1_ref: [H]          SMEM
      w2_ref: [C, H]       SMEM
      b2_ref: [C]          SMEM
      o_ref : [C, TR, LC]  VMEM  softmax probabilities
    """
    H, F = w1_ref.shape
    C = w2_ref.shape[0]

    # Dense [TR, LC] slabs, one per input feature.
    xs = [x_ref[k] for k in range(F)]

    # --- Layer 1: Linear(F -> H) + ReLU, unrolled as SMEM-scalar broadcast FMAs on
    # the VPU (K=2/N=4 contraction would be >96% padding on any MXU).  Bias is folded
    # into the first product so the accumulator starts as an affine term.
    hidden = []
    for j in range(H):
        acc = xs[0] * w1_ref[j, 0] + b1_ref[j]
        for k in range(1, F):
            acc = acc + xs[k] * w1_ref[j, k]
        hidden.append(jnp.maximum(acc, 0.0))

    # --- Layer 2: Linear(H -> C), same unrolled + bias-folded form.
    logits = []
    for c in range(C):
        acc = hidden[0] * w2_ref[c, 0] + b2_ref[c]
        for j in range(1, H):
            acc = acc + hidden[j] * w2_ref[c, j]
        logits.append(acc)

    # --- Softmax over classes (dim=1 of the original [B, C] layout): classes live on
    # the leading axis, so this is elementwise max/add across C dense slabs — pure VPU
    # (no cross-lane XLU reduce), plus EUP exp/reciprocal.
    m = logits[0]
    for c in range(1, C):
        m = jnp.maximum(m, logits[c])
    exps = [jnp.exp(l - m) for l in logits]
    denom = exps[0]
    for c in range(1, C):
        denom = denom + exps[c]
    # EUP reciprocal (frees the VALU slot on v7x) + one Newton step to recover
    # ~f32-exact row sums (keeps the 1e-5 checks tight).
    inv = pl.reciprocal(denom, approx=True)
    inv = inv * (2.0 - denom * inv)
    for c in range(C):
        o_ref[c] = (exps[c] * inv).astype(o_ref.dtype)


def multiclass_net_forward(x, w1, b1, w2, b2, *, tile_rows=256, lane_cols=512):
    """Forward pass of MultiClassNet.

    Args:
      x : [B, F] float32
      w1: [H, F] float32 (PyTorch nn.Linear layout),  b1: [H] float32
      w2: [C, H] float32,                             b2: [C] float32
      tile_rows/lane_cols: batch tile = tile_rows x lane_cols elements per grid step
        (defaults give 128K elements ≈ 1 MiB in / 1.5 MiB out per step; safe on
        v5e/v6e/v7x scoped-VMEM defaults).
    Returns:
      [B, C] float32 softmax probabilities (rows sum to 1).
    """
    B, F = x.shape
    C = w2.shape[0]

    # Batch -> (sublane-rows, lanes).  Lanes: multiple of 128; rows tile: multiple of 8.
    lc = min(lane_cols, _round_up(B, 128))
    r_total = -(-B // lc)                      # ceil(B / lc)
    tr = min(tile_rows, _round_up(r_total, 8))
    r_pad = _round_up(r_total, tr)
    b_pad = r_pad * lc

    # Layout plumbing to/from the PyTorch boundary.  Zero padding keeps the padded
    # batch slots finite through exp/softmax; they are sliced off below and, being
    # per-element (per sublane/lane slot), can never contaminate valid rows.
    x_t = x.T                                              # [F, B]
    if b_pad != B:
        x_t = jnp.pad(x_t, ((0, 0), (0, b_pad - B)))
    x3 = x_t.reshape(F, r_pad, lc)                         # [F, R, LC]

    smem = pl.BlockSpec(memory_space=pltpu.MemorySpace.SMEM)

    out3 = pl.pallas_call(
        _mlp_kernel,
        out_shape=jax.ShapeDtypeStruct((C, r_pad, lc), jnp.float32),
        grid=(r_pad // tr,),
        in_specs=[
            pl.BlockSpec((F, tr, lc), lambda i: (0, i, 0)),   # activations: tiled batch
            smem,                                             # w1: SMEM-resident
            smem,                                             # b1
            smem,                                             # w2
            smem,                                             # b2
        ],
        out_specs=pl.BlockSpec((C, tr, lc), lambda i: (0, i, 0)),
        compiler_params=pltpu.CompilerParams(
            dimension_semantics=("parallel",),                # v7x: shard batch over 2 TCs
        ),
    )(x3, w1, b1, w2, b2)

    out_t = out3.reshape(C, b_pad)[:, :B]                    # [C, B]
    return out_t.T                                           # back to [B, C]


if __name__ == "__main__":
    num_features = 2
    batch = 8

    key = jax.random.PRNGKey(0)
    kx, kw1, kb1, kw2, kb2 = jax.random.split(key, 5)

    # Deterministic synthetic parameters (PyTorch nn.Linear shapes).
    x = jax.random.normal(kx, (batch, num_features), dtype=jnp.float32)
    w1 = jax.random.normal(kw1, (4, num_features), dtype=jnp.float32) * 0.5
    b1 = jax.random.normal(kb1, (4,), dtype=jnp.float32) * 0.1
    w2 = jax.random.normal(kw2, (3, 4), dtype=jnp.float32) * 0.5
    b2 = jax.random.normal(kb2, (3,), dtype=jnp.float32) * 0.1

    y = multiclass_net_forward(x, w1, b1, w2, b2)
    y = jax.block_until_ready(y)

    # Pure-JAX reference of the same forward semantics.
    h_ref = jnp.maximum(x @ w1.T + b1, 0.0)
    logits_ref = h_ref @ w2.T + b2
    y_ref = jax.nn.softmax(logits_ref, axis=1)
    assert y.shape == (batch, 3)
    assert jnp.allclose(y, y_ref, atol=1e-5), "mismatch vs reference"
    assert jnp.allclose(jnp.sum(y, axis=1), 1.0, atol=1e-5)

    print("KERNEL_OK")
</pallas_src>

<mosaic_0001>
module attributes {stable_mosaic.version = 11 : i64} {
  func.func @_mlp_kernel(%arg0: i32, %arg1: memref<2x8x128xf32, #tpu.memory_space<vmem>>, %arg2: memref<4x2xf32, #tpu.memory_space<smem>>, %arg3: memref<4xf32, #tpu.memory_space<smem>>, %arg4: memref<3x4xf32, #tpu.memory_space<smem>>, %arg5: memref<3xf32, #tpu.memory_space<smem>>, %arg6: memref<3x8x128xf32, #tpu.memory_space<vmem>>) attributes {dimension_semantics = [#tpu.dimension_semantics<parallel>], iteration_bounds = array<i64: 1>, scalar_prefetch = 0 : i64, scratch_operands = 0 : i64, tpu.core_type = #tpu.core_type<tc>, window_params = [{transform_indices = @transform_0, window_bounds = array<i64: 2, 8, 128>}, {transform_indices = @transform_1, window_bounds = array<i64: 4, 2>}, {transform_indices = @transform_2, window_bounds = array<i64: 4>}, {transform_indices = @transform_3, window_bounds = array<i64: 3, 4>}, {transform_indices = @transform_4, window_bounds = array<i64: 3>}, {transform_indices = @transform_5, window_bounds = array<i64: 3, 8, 128>}]} {
    %c0 = arith.constant 0 : index
    %c0_0 = arith.constant 0 : index
    %c0_1 = arith.constant 0 : index
    %0 = vector.load %arg1[%c0, %c0_0, %c0_1] : memref<2x8x128xf32, #tpu.memory_space<vmem>>, vector<1x8x128xf32>
    %1 = vector.shape_cast %0 : vector<1x8x128xf32> to vector<8x128xf32>
    %c1 = arith.constant 1 : index
    %c0_2 = arith.constant 0 : index
    %c0_3 = arith.constant 0 : index
    %2 = vector.load %arg1[%c1, %c0_2, %c0_3] : memref<2x8x128xf32, #tpu.memory_space<vmem>>, vector<1x8x128xf32>
    %3 = vector.shape_cast %2 : vector<1x8x128xf32> to vector<8x128xf32>
    %c0_4 = arith.constant 0 : index
    %c0_5 = arith.constant 0 : index
    %4 = memref.load %arg2[%c0_4, %c0_5] : memref<4x2xf32, #tpu.memory_space<smem>>
    %5 = vector.broadcast %4 : f32 to vector<8x128xf32>
    %6 = arith.mulf %1, %5 : vector<8x128xf32>
    %c0_6 = arith.constant 0 : index
    %7 = memref.load %arg3[%c0_6] : memref<4xf32, #tpu.memory_space<smem>>
    %8 = vector.broadcast %7 : f32 to vector<8x128xf32>
    %9 = arith.addf %6, %8 : vector<8x128xf32>
    %c0_7 = arith.constant 0 : index
    %c1_8 = arith.constant 1 : index
    %10 = memref.load %arg2[%c0_7, %c1_8] : memref<4x2xf32, #tpu.memory_space<smem>>
    %11 = vector.broadcast %10 : f32 to vector<8x128xf32>
    %12 = arith.mulf %3, %11 : vector<8x128xf32>
    %13 = arith.addf %9, %12 : vector<8x128xf32>
    %cst = arith.constant 0.000000e+00 : f32
    %14 = vector.broadcast %cst : f32 to vector<8x128xf32>
    %15 = arith.maximumf %13, %14 : vector<8x128xf32>
    %c1_9 = arith.constant 1 : index
    %c0_10 = arith.constant 0 : index
    %16 = memref.load %arg2[%c1_9, %c0_10] : memref<4x2xf32, #tpu.memory_space<smem>>
    %17 = vector.broadcast %16 : f32 to vector<8x128xf32>
    %18 = arith.mulf %1, %17 : vector<8x128xf32>
    %c1_11 = arith.constant 1 : index
    %19 = memref.load %arg3[%c1_11] : memref<4xf32, #tpu.memory_space<smem>>
    %20 = vector.broadcast %19 : f32 to vector<8x128xf32>
    %21 = arith.addf %18, %20 : vector<8x128xf32>
    %c1_12 = arith.constant 1 : index
    %c1_13 = arith.constant 1 : index
    %22 = memref.load %arg2[%c1_12, %c1_13] : memref<4x2xf32, #tpu.memory_space<smem>>
    %23 = vector.broadcast %22 : f32 to vector<8x128xf32>
    %24 = arith.mulf %3, %23 : vector<8x128xf32>
    %25 = arith.addf %21, %24 : vector<8x128xf32>
    %cst_14 = arith.constant 0.000000e+00 : f32
    %26 = vector.broadcast %cst_14 : f32 to vector<8x128xf32>
    %27 = arith.maximumf %25, %26 : vector<8x128xf32>
    %c2 = arith.constant 2 : index
    %c0_15 = arith.constant 0 : index
    %28 = memref.load %arg2[%c2, %c0_15] : memref<4x2xf32, #tpu.memory_space<smem>>
    %29 = vector.broadcast %28 : f32 to vector<8x128xf32>
    %30 = arith.mulf %1, %29 : vector<8x128xf32>
    %c2_16 = arith.constant 2 : index
    %31 = memref.load %arg3[%c2_16] : memref<4xf32, #tpu.memory_space<smem>>
    %32 = vector.broadcast %31 : f32 to vector<8x128xf32>
    %33 = arith.addf %30, %32 : vector<8x128xf32>
    %c2_17 = arith.constant 2 : index
    %c1_18 = arith.constant 1 : index
    %34 = memref.load %arg2[%c2_17, %c1_18] : memref<4x2xf32, #tpu.memory_space<smem>>
    %35 = vector.broadcast %34 : f32 to vector<8x128xf32>
    %36 = arith.mulf %3, %35 : vector<8x128xf32>
    %37 = arith.addf %33, %36 : vector<8x128xf32>
    %cst_19 = arith.constant 0.000000e+00 : f32
    %38 = vector.broadcast %cst_19 : f32 to vector<8x128xf32>
    %39 = arith.maximumf %37, %38 : vector<8x128xf32>
    %c3 = arith.constant 3 : index
    %c0_20 = arith.constant 0 : index
    %40 = memref.load %arg2[%c3, %c0_20] : memref<4x2xf32, #tpu.memory_space<smem>>
    %41 = vector.broadcast %40 : f32 to vector<8x128xf32>
    %42 = arith.mulf %1, %41 : vector<8x128xf32>
    %c3_21 = arith.constant 3 : index
    %43 = memref.load %arg3[%c3_21] : memref<4xf32, #tpu.memory_space<smem>>
    %44 = vector.broadcast %43 : f32 to vector<8x128xf32>
    %45 = arith.addf %42, %44 : vector<8x128xf32>
    %c3_22 = arith.constant 3 : index
    %c1_23 = arith.constant 1 : index
    %46 = memref.load %arg2[%c3_22, %c1_23] : memref<4x2xf32, #tpu.memory_space<smem>>
    %47 = vector.broadcast %46 : f32 to vector<8x128xf32>
    %48 = arith.mulf %3, %47 : vector<8x128xf32>
    %49 = arith.addf %45, %48 : vector<8x128xf32>
    %cst_24 = arith.constant 0.000000e+00 : f32
    %50 = vector.broadcast %cst_24 : f32 to vector<8x128xf32>
    %51 = arith.maximumf %49, %50 : vector<8x128xf32>
    %c0_25 = arith.constant 0 : index
    %c0_26 = arith.constant 0 : index
    %52 = memref.load %arg4[%c0_25, %c0_26] : memref<3x4xf32, #tpu.memory_space<smem>>
    %53 = vector.broadcast %52 : f32 to vector<8x128xf32>
    %54 = arith.mulf %15, %53 : vector<8x128xf32>
    %c0_27 = arith.constant 0 : index
    %55 = memref.load %arg5[%c0_27] : memref<3xf32, #tpu.memory_space<smem>>
    %56 = vector.broadcast %55 : f32 to vector<8x128xf32>
    %57 = arith.addf %54, %56 : vector<8x128xf32>
    %c0_28 = arith.constant 0 : index
    %c1_29 = arith.constant 1 : index
    %58 = memref.load %arg4[%c0_28, %c1_29] : memref<3x4xf32, #tpu.memory_space<smem>>
    %59 = vector.broadcast %58 : f32 to vector<8x128xf32>
    %60 = arith.mulf %27, %59 : vector<8x128xf32>
    %61 = arith.addf %57, %60 : vector<8x128xf32>
    %c0_30 = arith.constant 0 : index
    %c2_31 = arith.constant 2 : index
    %62 = memref.load %arg4[%c0_30, %c2_31] : memref<3x4xf32, #tpu.memory_space<smem>>
    %63 = vector.broadcast %62 : f32 to vector<8x128xf32>
    %64 = arith.mulf %39, %63 : vector<8x128xf32>
    %65 = arith.addf %61, %64 : vector<8x128xf32>
    %c0_32 = arith.constant 0 : index
    %c3_33 = arith.constant 3 : index
    %66 = memref.load %arg4[%c0_32, %c3_33] : memref<3x4xf32, #tpu.memory_space<smem>>
    %67 = vector.broadcast %66 : f32 to vector<8x128xf32>
    %68 = arith.mulf %51, %67 : vector<8x128xf32>
    %69 = arith.addf %65, %68 : vector<8x128xf32>
    %c1_34 = arith.constant 1 : index
    %c0_35 = arith.constant 0 : index
    %70 = memref.load %arg4[%c1_34, %c0_35] : memref<3x4xf32, #tpu.memory_space<smem>>
    %71 = vector.broadcast %70 : f32 to vector<8x128xf32>
    %72 = arith.mulf %15, %71 : vector<8x128xf32>
    %c1_36 = arith.constant 1 : index
    %73 = memref.load %arg5[%c1_36] : memref<3xf32, #tpu.memory_space<smem>>
    %74 = vector.broadcast %73 : f32 to vector<8x128xf32>
    %75 = arith.addf %72, %74 : vector<8x128xf32>
    %c1_37 = arith.constant 1 : index
    %c1_38 = arith.constant 1 : index
    %76 = memref.load %arg4[%c1_37, %c1_38] : memref<3x4xf32, #tpu.memory_space<smem>>
    %77 = vector.broadcast %76 : f32 to vector<8x128xf32>
    %78 = arith.mulf %27, %77 : vector<8x128xf32>
    %79 = arith.addf %75, %78 : vector<8x128xf32>
    %c1_39 = arith.constant 1 : index
    %c2_40 = arith.constant 2 : index
    %80 = memref.load %arg4[%c1_39, %c2_40] : memref<3x4xf32, #tpu.memory_space<smem>>
    %81 = vector.broadcast %80 : f32 to vector<8x128xf32>
    %82 = arith.mulf %39, %81 : vector<8x128xf32>
    %83 = arith.addf %79, %82 : vector<8x128xf32>
    %c1_41 = arith.constant 1 : index
    %c3_42 = arith.constant 3 : index
    %84 = memref.load %arg4[%c1_41, %c3_42] : memref<3x4xf32, #tpu.memory_space<smem>>
    %85 = vector.broadcast %84 : f32 to vector<8x128xf32>
    %86 = arith.mulf %51, %85 : vector<8x128xf32>
    %87 = arith.addf %83, %86 : vector<8x128xf32>
    %c2_43 = arith.constant 2 : index
    %c0_44 = arith.constant 0 : index
    %88 = memref.load %arg4[%c2_43, %c0_44] : memref<3x4xf32, #tpu.memory_space<smem>>
    %89 = vector.broadcast %88 : f32 to vector<8x128xf32>
    %90 = arith.mulf %15, %89 : vector<8x128xf32>
    %c2_45 = arith.constant 2 : index
    %91 = memref.load %arg5[%c2_45] : memref<3xf32, #tpu.memory_space<smem>>
    %92 = vector.broadcast %91 : f32 to vector<8x128xf32>
    %93 = arith.addf %90, %92 : vector<8x128xf32>
    %c2_46 = arith.constant 2 : index
    %c1_47 = arith.constant 1 : index
    %94 = memref.load %arg4[%c2_46, %c1_47] : memref<3x4xf32, #tpu.memory_space<smem>>
    %95 = vector.broadcast %94 : f32 to vector<8x128xf32>
    %96 = arith.mulf %27, %95 : vector<8x128xf32>
    %97 = arith.addf %93, %96 : vector<8x128xf32>
    %c2_48 = arith.constant 2 : index
    %c2_49 = arith.constant 2 : index
    %98 = memref.load %arg4[%c2_48, %c2_49] : memref<3x4xf32, #tpu.memory_space<smem>>
    %99 = vector.broadcast %98 : f32 to vector<8x128xf32>
    %100 = arith.mulf %39, %99 : vector<8x128xf32>
    %101 = arith.addf %97, %100 : vector<8x128xf32>
    %c2_50 = arith.constant 2 : index
    %c3_51 = arith.constant 3 : index
    %102 = memref.load %arg4[%c2_50, %c3_51] : memref<3x4xf32, #tpu.memory_space<smem>>
    %103 = vector.broadcast %102 : f32 to vector<8x128xf32>
    %104 = arith.mulf %51, %103 : vector<8x128xf32>
    %105 = arith.addf %101, %104 : vector<8x128xf32>
    %106 = arith.maximumf %69, %87 : vector<8x128xf32>
    %107 = arith.maximumf %106, %105 : vector<8x128xf32>
    %108 = arith.subf %69, %107 : vector<8x128xf32>
    %109 = math.exp %108 : vector<8x128xf32>
    %110 = arith.subf %87, %107 : vector<8x128xf32>
    %111 = math.exp %110 : vector<8x128xf32>
    %112 = arith.subf %105, %107 : vector<8x128xf32>
    %113 = math.exp %112 : vector<8x128xf32>
    %114 = arith.addf %109, %111 : vector<8x128xf32>
    %115 = arith.addf %114, %113 : vector<8x128xf32>
    %116 = tpu.reciprocal %115 {approx = true} : vector<8x128xf32> -> vector<8x128xf32>
    %117 = arith.mulf %115, %116 : vector<8x128xf32>
    %cst_52 = arith.constant 2.000000e+00 : f32
    %118 = vector.broadcast %cst_52 : f32 to vector<8x128xf32>
    %119 = arith.subf %118, %117 : vector<8x128xf32>
    %120 = arith.mulf %116, %119 : vector<8x128xf32>
    %121 = arith.mulf %109, %120 : vector<8x128xf32>
    %c0_53 = arith.constant 0 : index
    %c0_54 = arith.constant 0 : index
    %c0_55 = arith.constant 0 : index
    %122 = vector.load %arg6[%c0_53, %c0_54, %c0_55] : memref<3x8x128xf32, #tpu.memory_space<vmem>>, vector<1x8x128xf32>
    %123 = vector.shape_cast %122 : vector<1x8x128xf32> to vector<8x128xf32>
    %124 = vector.shape_cast %121 : vector<8x128xf32> to vector<1x8x128xf32>
    tpu.vector_store %arg6[%c0_53, %c0_54, %c0_55], %124 {strides = array<i32>} : memref<3x8x128xf32, #tpu.memory_space<vmem>>, vector<1x8x128xf32>,
    %125 = arith.mulf %111, %120 : vector<8x128xf32>
    %c1_56 = arith.constant 1 : index
    %c0_57 = arith.constant 0 : index
    %c0_58 = arith.constant 0 : index
    %126 = vector.load %arg6[%c1_56, %c0_57, %c0_58] : memref<3x8x128xf32, #tpu.memory_space<vmem>>, vector<1x8x128xf32>
    %127 = vector.shape_cast %126 : vector<1x8x128xf32> to vector<8x128xf32>
    %128 = vector.shape_cast %125 : vector<8x128xf32> to vector<1x8x128xf32>
    tpu.vector_store %arg6[%c1_56, %c0_57, %c0_58], %128 {strides = array<i32>} : memref<3x8x128xf32, #tpu.memory_space<vmem>>, vector<1x8x128xf32>,
    %129 = arith.mulf %113, %120 : vector<8x128xf32>
    %c2_59 = arith.constant 2 : index
    %c0_60 = arith.constant 0 : index
    %c0_61 = arith.constant 0 : index
    %130 = vector.load %arg6[%c2_59, %c0_60, %c0_61] : memref<3x8x128xf32, #tpu.memory_space<vmem>>, vector<1x8x128xf32>
    %131 = vector.shape_cast %130 : vector<1x8x128xf32> to vector<8x128xf32>
    %132 = vector.shape_cast %129 : vector<8x128xf32> to vector<1x8x128xf32>
    tpu.vector_store %arg6[%c2_59, %c0_60, %c0_61], %132 {strides = array<i32>} : memref<3x8x128xf32, #tpu.memory_space<vmem>>, vector<1x8x128xf32>,
    return
  }
  func.func @transform_0(%arg0: i32) -> (i32, i32, i32) {
    %c0_i32 = arith.constant 0 : i32
    %c0_i32_0 = arith.constant 0 : i32
    %c0_i32_1 = arith.constant 0 : i32
    return %c0_i32, %arg0, %c0_i32_0 : i32, i32, i32
  }
  func.func @transform_1(%arg0: i32) -> (i32, i32) {
    %c0_i32 = arith.constant 0 : i32
    %c0_i32_0 = arith.constant 0 : i32
    %c0_i32_1 = arith.constant 0 : i32
    return %c0_i32, %c0_i32_0 : i32, i32
  }
  func.func @transform_2(%arg0: i32) -> i32 {
    %c0_i32 = arith.constant 0 : i32
    %c0_i32_0 = arith.constant 0 : i32
    return %c0_i32 : i32
  }
  func.func @transform_3(%arg0: i32) -> (i32, i32) {
    %c0_i32 = arith.constant 0 : i32
    %c0_i32_0 = arith.constant 0 : i32
    %c0_i32_1 = arith.constant 0 : i32
    return %c0_i32, %c0_i32_0 : i32, i32
  }
  func.func @transform_4(%arg0: i32) -> i32 {
    %c0_i32 = arith.constant 0 : i32
    %c0_i32_0 = arith.constant 0 : i32
    return %c0_i32 : i32
  }
  func.func @transform_5(%arg0: i32) -> (i32, i32, i32) {
    %c0_i32 = arith.constant 0 : i32
    %c0_i32_0 = arith.constant 0 : i32
    %c0_i32_1 = arith.constant 0 : i32
    return %c0_i32, %arg0, %c0_i32_0 : i32, i32, i32
  }
}

</mosaic_0001>

<llo_original>
// kernel: tpu_custom_call.1
$region0: #{tpu_custom_call.1}
  #allocation0 [shape = 'u32[]', space=smem, size = 0x4, offset = 0x4, fixed_abs, tag = 'smem constant byte address 0x4 - core index']
  #allocation1 [shape = 'u32[144,128]{1,0:T(1,128)}', space=vmem, size = 0x12000, scoped, tag = 'internal scratch']
  %s0 = inlined_call_operand.hbm [shape: f32[2,8,128], index: 0, kind: input, shape index: {}]
  %s1 = inlined_call_operand.vmem [shape: f32[4,2], index: 1, kind: input, shape index: {}]
  %s2 = inlined_call_operand.vmem [shape: f32[4], index: 2, kind: input, shape index: {}]
  %s3 = inlined_call_operand.vmem [shape: f32[3,4], index: 3, kind: input, shape index: {}]
  %s4 = inlined_call_operand.vmem [shape: f32[3], index: 4, kind: input, shape index: {}]
  %s5 = inlined_call_operand.hbm [shape: f32[3,8,128], index: 5, kind: output, shape index: {}]
  %s6 = sld [smem:[#allocation0]]
  $region50: #{tpu_custom_call.1} parent=0
    _
  %s8 = ssub.s32 1, %s6
  %s9 = scalar_select 0, %s8, %s6
  $region1: #{tpu_custom_call.1} parent=0
    #allocation2 [shape = 'u8[8192]{0}', space=vmem, size = 0x2000, scoped, tag = 'input window, operand 0, single buffered']
    #allocation3 [shape = 's32[1]{0}', space=sflag, size = 0x4, scoped, tag = 'scoped memory for tpu_custom_call.1']
    #allocation4 [shape = 's32[1]{0}', space=sflag, size = 0x4, scoped, tag = 'scoped memory for tpu_custom_call.1']
    #allocation5 [shape = 's32[1]{0}', space=sflag, size = 0x4, scoped, tag = 'scoped memory for tpu_custom_call.1']
    #allocation6 [shape = 'u8[2048]{0}', space=smem, size = 0x800, scoped, tag = 'input window, operand 1, single buffered']
    #allocation7 [shape = 'u8[512]{0}', space=smem, size = 0x200, scoped, tag = 'input window, operand 2, single buffered']
    #allocation8 [shape = 's32[1]{0}', space=sflag, size = 0x4, scoped, tag = 'scoped memory for tpu_custom_call.1']
    #allocation9 [shape = 'u8[2048]{0}', space=smem, size = 0x800, scoped, tag = 'input window, operand 3, single buffered']
    #allocation10 [shape = 'u8[512]{0}', space=smem, size = 0x200, scoped, tag = 'input window, operand 4, single buffered']
    #allocation11 [shape = 's32[1]{0}', space=sflag, size = 0x4, scoped, tag = 'scoped memory for tpu_custom_call.1']
    #allocation12 [shape = 'u8[12288]{0}', space=vmem, size = 0x3000, scoped, tag = 'output window, operand 0, single buffered']
    %10 = vsyncpa [#allocation3], 0
    %11 = vsyncpa [#allocation5], 0
    %12 = vsyncpa [#allocation8], 0
    %13 = vsyncpa [#allocation11], 0
    %14 = vsyncpa [#allocation4], 0
    // Predicated region
    $region2: #{tpu_custom_call.1} parent=1 // pred_check
      _
    $region3: #{tpu_custom_call.1} parent=1 // pred_check_branch
      %16 = sbr.rel (0) target = $region5
    $region4: #{tpu_custom_call.1} parent=1 // pred_region
      %s18 = ssub.s32 256, 256
      %19 = vsyncadd [#allocation3], %s18
      %s20 = sshll.u32 [#allocation2], 4
      %s21 = int_to_ptr.vmem [resolvable:$true] %s20
      %26 = dma.hbm_to_vmem [thread:$0]  %s0, 256, %s21, [#allocation3], 128, 128, 8
    $region5: #{tpu_custom_call.1} parent=1 // pred_fallthru
      _
    // Predicated region
    $region6: #{tpu_custom_call.1} parent=1 // pred_check
      _
    $region7: #{tpu_custom_call.1} parent=1 // pred_check_branch
      %28 = sbr.rel (0) target = $region9
    $region8: #{tpu_custom_call.1} parent=1 // pred_region
      %s30 = ssub.s32 64, 64
      %31 = vsyncadd [#allocation5], %s30
      %s33 = sshll.u32 %s1, 4
      %s34 = int_to_ptr.vmem [resolvable:$true] %s33
      %36 = dma.vmem_to_smem %s34, 64, [#allocation6], [#allocation5]
    $region9: #{tpu_custom_call.1} parent=1 // pred_fallthru
      _
    // Predicated region
    $region10: #{tpu_custom_call.1} parent=1 // pred_check
      _
    $region11: #{tpu_custom_call.1} parent=1 // pred_check_branch
      %38 = sbr.rel (0) target = $region13
    $region12: #{tpu_custom_call.1} parent=1 // pred_region
      %s40 = ssub.s32 16, 16
      %41 = vsyncadd [#allocation8], %s40
      %s43 = sshll.u32 %s2, 4
      %s44 = int_to_ptr.vmem [resolvable:$true] %s43
      %46 = dma.vmem_to_smem %s44, 16, [#allocation7], [#allocation8]
    $region13: #{tpu_custom_call.1} parent=1 // pred_fallthru
      _
    // Predicated region
    $region14: #{tpu_custom_call.1} parent=1 // pred_check
      _
    $region15: #{tpu_custom_call.1} parent=1 // pred_check_branch
      %48 = sbr.rel (0) target = $region17
    $region16: #{tpu_custom_call.1} parent=1 // pred_region
      %s50 = ssub.s32 64, 64
      %51 = vsyncadd [#allocation8], %s50
      %s53 = sshll.u32 %s3, 4
      %s54 = int_to_ptr.vmem [resolvable:$true] %s53
      %56 = dma.vmem_to_smem %s54, 64, [#allocation9], [#allocation8]
    $region17: #{tpu_custom_call.1} parent=1 // pred_fallthru
      _
    // Predicated region
    $region18: #{tpu_custom_call.1} parent=1 // pred_check
      _
    $region19: #{tpu_custom_call.1} parent=1 // pred_check_branch
      %58 = sbr.rel (0) target = $region21
    $region20: #{tpu_custom_call.1} parent=1 // pred_region
      %s60 = ssub.s32 16, 16
      %61 = vsyncadd [#allocation11], %s60
      %s63 = sshll.u32 %s4, 4
      %s64 = int_to_ptr.vmem [resolvable:$true] %s63
      %66 = dma.vmem_to_smem %s64, 16, [#allocation10], [#allocation11]
    $region21: #{tpu_custom_call.1} parent=1 // pred_fallthru
      _
    // Predicated region
    $region22: #{tpu_custom_call.1} parent=1 // pred_check
      _
    $region23: #{tpu_custom_call.1} parent=1 // pred_check_branch
      %68 = sbr.rel (0) target = $region25
    $region24: #{tpu_custom_call.1} parent=1 // pred_region
      %69 = dma.done [#allocation3], 256
    $region25: #{tpu_custom_call.1} parent=1 // pred_fallthru
      _
    // Predicated region
    $region26: #{tpu_custom_call.1} parent=1 // pred_check
      _
    $region27: #{tpu_custom_call.1} parent=1 // pred_check_branch
      %71 = sbr.rel (0) target = $region29
    $region28: #{tpu_custom_call.1} parent=1 // pred_region
      %72 = dma.done [#allocation5], 64
    $region29: #{tpu_custom_call.1} parent=1 // pred_fallthru
      _
    // Predicated region
    $region30: #{tpu_custom_call.1} parent=1 // pred_check
      _
    $region31: #{tpu_custom_call.1} parent=1 // pred_check_branch
      %74 = sbr.rel (0) target = $region33
    $region32: #{tpu_custom_call.1} parent=1 // pred_region
      %75 = dma.done [#allocation8], 16
    $region33: #{tpu_custom_call.1} parent=1 // pred_fallthru
      _
    // Predicated region
    $region34: #{tpu_custom_call.1} parent=1 // pred_check
      _
    $region35: #{tpu_custom_call.1} parent=1 // pred_check_branch
      %77 = sbr.rel (0) target = $region37
    $region36: #{tpu_custom_call.1} parent=1 // pred_region
      %78 = dma.done [#allocation8], 64
    $region37: #{tpu_custom_call.1} parent=1 // pred_fallthru
      _
    // Predicated region
    $region38: #{tpu_custom_call.1} parent=1 // pred_check
      _
    $region39: #{tpu_custom_call.1} parent=1 // pred_check_branch
      %80 = sbr.rel (0) target = $region41
    $region40: #{tpu_custom_call.1} parent=1 // pred_region
      %81 = dma.done [#allocation11], 16
    $region41: #{tpu_custom_call.1} parent=1 // pred_fallthru
      _
    %82 = sfence
    %v83 = vld [vmem:[#allocation2] sm:$0xff]
    %s84 = scalar_lea.vmem [#allocation2], 8
    %v85 = vld [vmem:[%s84] sm:$0xff]
    %s86 = sld [smem:[#allocation6]]
    %v87 = vstv %s86
    %v88 = vmul.f32 %v83, %v87
    %s89 = sld [smem:[#allocation7]]
    %v90 = vstv %s89
    %v91 = vadd.f32 %v88, %v90
    %s92 = sld [smem:[#allocation6 + $0x1]]
    %v93 = vstv %s92
    %v94 = vmul.f32 %v85, %v93
    %v95 = vadd.f32 %v91, %v94
    %v96 = vmax.f32 %v95, 0.0
    %s97 = sld [smem:[#allocation6 + $0x80]]
    %v98 = vstv %s97
    %v99 = vmul.f32 %v83, %v98
    %s100 = sld [smem:[#allocation7 + $0x1]]
    %v101 = vstv %s100
    %v102 = vadd.f32 %v99, %v101
    %s103 = sld [smem:[#allocation6 + $0x81]]
    %v104 = vstv %s103
    %v105 = vmul.f32 %v85, %v104
    %v106 = vadd.f32 %v102, %v105
    %v107 = vmax.f32 %v106, 0.0
    %s108 = sld [smem:[#allocation6 + $0x100]]
    %v109 = vstv %s108
    %v110 = vmul.f32 %v83, %v109
    %s111 = sld [smem:[#allocation7 + $0x2]]
    %v112 = vstv %s111
    %v113 = vadd.f32 %v110, %v112
    %s114 = sld [smem:[#allocation6 + $0x101]]
    %v115 = vstv %s114
    %v116 = vmul.f32 %v85, %v115
    %v117 = vadd.f32 %v113, %v116
    %v118 = vmax.f32 %v117, 0.0
    %s119 = sld [smem:[#allocation6 + $0x180]]
    %v120 = vstv %s119
    %v121 = vmul.f32 %v83, %v120
    %s122 = sld [smem:[#allocation7 + $0x3]]
    %v123 = vstv %s122
    %v124 = vadd.f32 %v121, %v123
    %s125 = sld [smem:[#allocation6 + $0x181]]
    %v126 = vstv %s125
    %v127 = vmul.f32 %v85, %v126
    %v128 = vadd.f32 %v124, %v127
    %v129 = vmax.f32 %v128, 0.0
    %s130 = sld [smem:[#allocation9]]
    %v131 = vstv %s130
    %v132 = vmul.f32 %v96, %v131
    %s133 = sld [smem:[#allocation10]]
    %v134 = vstv %s133
    %v135 = vadd.f32 %v132, %v134
    %s136 = sld [smem:[#allocation9 + $0x1]]
    %v137 = vstv %s136
    %v138 = vmul.f32 %v107, %v137
    %v139 = vadd.f32 %v135, %v138
    %s140 = sld [smem:[#allocation9 + $0x2]]
    %v141 = vstv %s140
    %v142 = vmul.f32 %v118, %v141
    %v143 = vadd.f32 %v139, %v142
    %s144 = sld [smem:[#allocation9 + $0x3]]
    %v145 = vstv %s144
    %v146 = vmul.f32 %v129, %v145
    %v147 = vadd.f32 %v143, %v146
    %s148 = sld [smem:[#allocation9 + $0x80]]
    %v149 = vstv %s148
    %v150 = vmul.f32 %v96, %v149
    %s151 = sld [smem:[#allocation10 + $0x1]]
    %v152 = vstv %s151
    %v153 = vadd.f32 %v150, %v152
    %s154 = sld [smem:[#allocation9 + $0x81]]
    %v155 = vstv %s154
    %v156 = vmul.f32 %v107, %v155
    %v157 = vadd.f32 %v153, %v156
    %s158 = sld [smem:[#allocation9 + $0x82]]
    %v159 = vstv %s158
    %v160 = vmul.f32 %v118, %v159
    %v161 = vadd.f32 %v157, %v160
    %s162 = sld [smem:[#allocation9 + $0x83]]
    %v163 = vstv %s162
    %v164 = vmul.f32 %v129, %v163
    %v165 = vadd.f32 %v161, %v164
    %s166 = sld [smem:[#allocation9 + $0x100]]
    %v167 = vstv %s166
    %v168 = vmul.f32 %v96, %v167
    %s169 = sld [smem:[#allocation10 + $0x2]]
    %v170 = vstv %s169
    %v171 = vadd.f32 %v168, %v170
    %s172 = sld [smem:[#allocation9 + $0x101]]
    %v173 = vstv %s172
    %v174 = vmul.f32 %v107, %v173
    %v175 = vadd.f32 %v171, %v174
    %s176 = sld [smem:[#allocation9 + $0x102]]
    %v177 = vstv %s176
    %v178 = vmul.f32 %v118, %v177
    %v179 = vadd.f32 %v175, %v178
    %s180 = sld [smem:[#allocation9 + $0x103]]
    %v181 = vstv %s180
    %v182 = vmul.f32 %v129, %v181
    %v183 = vadd.f32 %v179, %v182
    %v184 = vmax.f32 %v147, %v165
    %v185 = vmax.f32 %v184, %v183
    %v186 = vsub.f32 %v147, %v185
    %v187 = vmul.f32 %v186, 1.442695
    %v188 = vpow.pop %v187
    %v189 = vsub.f32 %v165, %v185
    %v190 = vmul.f32 %v189, 1.442695
    %v191 = vpow.pop %v190
    %v192 = vsub.f32 %v183, %v185
    %v193 = vmul.f32 %v192, 1.442695
    %v194 = vpow.pop %v193
    %v195 = vadd.f32 %v188, %v191
    %v196 = vadd.f32 %v195, %v194
    %v197 = vrcp.pop %v196
    %v198 = vmul.f32 %v196, %v197
    %v199 = vsub.f32 2.0, %v198
    %v200 = vmul.f32 %v197, %v199
    %v201 = vmul.f32 %v188, %v200
    %202 = vst [vmem:[#allocation12] sm:$0xff] %v201
    %v203 = vmul.f32 %v191, %v200
    %s204 = scalar_lea.vmem [#allocation12], 8
    %205 = vst [vmem:[%s204] sm:$0xff] %v203
    %v206 = vmul.f32 %v194, %v200
    %s207 = scalar_lea.vmem [#allocation12], 16
    %208 = vst [vmem:[%s207] sm:$0xff] %v206
    // Predicated region
    $region42: #{tpu_custom_call.1} parent=1 // pred_check
      _
    $region43: #{tpu_custom_call.1} parent=1 // pred_check_branch
      %210 = sbr.rel (0) target = $region45
    $region44: #{tpu_custom_call.1} parent=1 // pred_region
      %s212 = ssub.s32 384, 384
      %213 = vsyncadd [#allocation4], %s212
      %s214 = sshll.u32 [#allocation12], 4
      %s215 = int_to_ptr.vmem [resolvable:$true] %s214
      %220 = dma.vmem_to_hbm [thread:$0]  %s215, 384, %s5, [#allocation4], 128, 128, 8
    $region45: #{tpu_custom_call.1} parent=1 // pred_fallthru
      _
    // Predicated region
    $region46: #{tpu_custom_call.1} parent=1 // pred_check
      _
    $region47: #{tpu_custom_call.1} parent=1 // pred_check_branch
      %222 = sbr.rel (0) target = $region49
    $region48: #{tpu_custom_call.1} parent=1 // pred_region
      %223 = dma.done [#allocation4], 384
    $region49: #{tpu_custom_call.1} parent=1 // pred_fallthru
      _
    %224 = vsyncpa [#allocation3], 1
    %225 = vsyncpa [#allocation4], 1
    %226 = vsyncpa [#allocation5], 1
    %227 = vsyncpa [#allocation8], 1
    %228 = vsyncpa [#allocation11], 1

</llo_original>
